<compile_context>
chip_gen: v5e
topology: v5e:2x2
jax: 0.10.0
libtpu: 0.0.40
codegen_flags: <defaults>
</compile_context>

<pallas_src>
import functools

import jax
import jax.numpy as jnp
from jax.experimental import pallas as pl
from jax.experimental.pallas import tpu as pltpu


def _gbn_kernel(x_ref, gamma_ref, beta_ref, same_ref, o_ref, *, eps: float, m: int):
    # x_ref : (1, 1, R, HWp)  — R = Gb*Cg channel rows of Gb whole groups,
    #                           HWp = H*W zero-padded to a multiple of 128.
    # gamma_ref / beta_ref : (1, R, 1) — affine params for these rows.
    # same_ref : (R, R) f32   — resident mask, same[i, j] = 1 iff same group.

    # ---- Pass 1: per-row (per-channel) partial reductions (streaming read).
    x1 = x_ref[...].astype(jnp.float32)
    row_s = jnp.sum(x1, axis=3, keepdims=True)[0, 0]        # (R, 1)
    row_ss = jnp.sum(x1 * x1, axis=3, keepdims=True)[0, 0]  # (R, 1)

    # Segment-sum within groups AND broadcast back to rows with ONE tiny matvec.
    stats2 = jnp.concatenate([row_s, row_ss], axis=1)        # (R, 2)
    seg = jnp.dot(same_ref[...], stats2,
                  preferred_element_type=jnp.float32)        # (R, 2)
    s = seg[:, 0:1]                                          # (R, 1)
    ss = seg[:, 1:2]                                         # (R, 1)

    inv_m = 1.0 / m
    inv_m1 = 1.0 / (m - 1)
    mean = s * inv_m
    # One-pass (unbiased) variance, clamped against cancellation.
    var = jnp.maximum((ss - s * s * inv_m) * inv_m1, 0.0)
    inv = 1.0 / (jnp.sqrt(var) + eps)                        # eps on std (torch)

    gamma = gamma_ref[0].astype(jnp.float32)                 # (R, 1)
    beta = beta_ref[0].astype(jnp.float32)                   # (R, 1)
    scale = gamma * inv                                      # (R, 1)
    shift = beta - mean * scale                              # (R, 1)

    # ---- Pass 2: single fused multiply-add over the tile (streaming re-read,
    # lane-dense store).  Re-indexing x_ref keeps the upcast at vreg granularity.
    x2 = x_ref[...].astype(jnp.float32)
    o_ref[...] = (x2 * scale[None, None] + shift[None, None]).astype(o_ref.dtype)


def group_batchnorm_2d(x, gamma, beta, group_num: int = 16, eps: float = 1e-10,
                       max_block_bytes: int = 4 << 20):
    """x: (N, C, H, W) NCHW.  gamma/beta: (C, 1, 1) as in the torch module."""
    N, C, H, W = x.shape
    G = group_num
    assert C >= G and C % G == 0, "kernel assumes channels divisible by group_num"
    # TODO(synk): the torch view(N, G, -1) only needs C*H*W % G == 0; the
    # channel-grouped layout here additionally assumes C % G == 0.
    Cg = C // G
    HW = H * W
    itemsize = jnp.dtype(x.dtype).itemsize

    # Lane-dense last dim: pad H*W up to a multiple of 128 (zeros keep the
    # sums exact since m stays Cg*HW_true; padded lanes are sliced off below).
    HWp = ((HW + 127) // 128) * 128

    # Pack as many whole groups per block as fit under the byte cap, preferring
    # R = Gb*Cg that is a multiple of the sublane tile (8 f32 / 16 bf16).
    sublane_mult = max(8, 32 // itemsize)
    candidates = [g for g in range(1, G + 1)
                  if G % g == 0 and g * Cg * HWp * itemsize <= max_block_bytes]
    if not candidates:
        # TODO(synk): a single group exceeds the block cap — add an HW grid
        # axis with a carried running-stats reduction for very large H*W.
        candidates = [1]
    aligned = [g for g in candidates if (g * Cg) % sublane_mult == 0]
    Gb = max(aligned) if aligned else max(candidates)
    R = Gb * Cg          # channel rows per block (sublane dim)
    GC = G // Gb         # number of group-chunks
    # TODO(synk): when N*GC < 4 on v7x, add an HW grid axis so both TensorCores
    # get work (currently one core may idle for tiny N).

    x_r = x.reshape(N, C, HW)
    if HWp != HW:
        x_r = jnp.pad(x_r, ((0, 0), (0, 0), (0, HWp - HW)))
    x_r = x_r.reshape(N, GC, R, HWp)
    gamma_r = gamma.reshape(GC, R, 1)
    beta_r = beta.reshape(GC, R, 1)

    # Constant group-membership mask, hoisted out of the kernel (resident input).
    rows = jnp.arange(R, dtype=jnp.int32) // Cg
    same = (rows[:, None] == rows[None, :]).astype(jnp.float32)   # (R, R)

    # Explicit VMEM budget: double-buffered in + out blocks, f32 working set,
    # params/mask, plus headroom.  Clamp to [16, 48] MiB (safe on v5e..v7x).
    block_bytes = R * HWp * itemsize
    f32_block = R * HWp * 4
    small = (R * R + 4 * R) * 4 * 2
    vmem_limit = 2 * block_bytes + 2 * block_bytes + 2 * f32_block + small + (1 << 20)
    vmem_limit = int(min(max(vmem_limit, 16 << 20), 48 << 20))

    kernel = functools.partial(_gbn_kernel, eps=float(eps), m=Cg * HW)

    cost = pl.CostEstimate(
        flops=5 * N * C * HW,
        transcendentals=N * G,
        bytes_accessed=2 * N * GC * R * HWp * itemsize + 2 * C * 4,
    )

    out = pl.pallas_call(
        kernel,
        out_shape=jax.ShapeDtypeStruct((N, GC, R, HWp), x.dtype),
        grid_spec=pltpu.PrefetchScalarGridSpec(
            num_scalar_prefetch=0,
            grid=(N, GC),
            in_specs=[
                pl.BlockSpec((1, 1, R, HWp), lambda n, c: (n, c, 0, 0)),
                pl.BlockSpec((1, R, 1), lambda n, c: (c, 0, 0)),
                pl.BlockSpec((1, R, 1), lambda n, c: (c, 0, 0)),
                pl.BlockSpec((R, R), lambda n, c: (0, 0)),   # resident mask
            ],
            out_specs=pl.BlockSpec((1, 1, R, HWp), lambda n, c: (n, c, 0, 0)),
        ),
        compiler_params=pltpu.CompilerParams(
            dimension_semantics=("parallel", "parallel"),
            vmem_limit_bytes=vmem_limit,
        ),
        cost_estimate=cost,
    )(x_r, gamma_r, beta_r, same)

    out = out.reshape(N, C, HWp)
    if HWp != HW:
        out = out[:, :, :HW]
    return out.reshape(N, C, H, W)


def _reference(x, gamma, beta, group_num, eps):
    """Pure-JAX replica of the torch forward for verification."""
    N, C, H, W = x.shape
    xr = x.reshape(N, group_num, -1)
    mean = xr.mean(axis=2, keepdims=True)
    # unbiased std (torch default)
    std = jnp.sqrt(
        jnp.sum((xr - mean) ** 2, axis=2, keepdims=True) / (xr.shape[2] - 1)
    )
    xn = (xr - mean) / (std + eps)
    xn = xn.reshape(N, C, H, W)
    return xn * gamma.reshape(1, C, 1, 1) + beta.reshape(1, C, 1, 1)


if __name__ == "__main__":
    # Small shapes consistent with the module (assert c_num >= group_num).
    N, C, H, W = 2, 16, 16, 16
    GROUP_NUM = 4
    EPS = 1e-10

    key = jax.random.PRNGKey(0)
    kx, kg = jax.random.split(key)

    x = jax.random.normal(kx, (N, C, H, W), dtype=jnp.float32)
    # Deterministic parameter init mirroring __init__: gamma ~ randn, beta = 0.
    gamma = jax.random.normal(kg, (C, 1, 1), dtype=jnp.float32)
    beta = jnp.zeros((C, 1, 1), dtype=jnp.float32)

    out = group_batchnorm_2d(x, gamma, beta, group_num=GROUP_NUM, eps=EPS)
    out = jax.block_until_ready(out)

    ref = _reference(x, gamma, beta, GROUP_NUM, EPS)
    assert out.shape == (N, C, H, W)
    assert jnp.allclose(out, ref, atol=5e-5, rtol=1e-5), "mismatch vs reference"

    print("KERNEL_OK")
</pallas_src>

<mosaic_0001>
module attributes {stable_mosaic.version = 11 : i64} {
  func.func @_gbn_kernel(%arg0: i32, %arg1: i32, %arg2: memref<1x1x16x256xf32, #tpu.memory_space<vmem>>, %arg3: memref<1x16x1xf32, #tpu.memory_space<vmem>>, %arg4: memref<1x16x1xf32, #tpu.memory_space<vmem>>, %arg5: memref<16x16xf32, #tpu.memory_space<vmem>>, %arg6: memref<1x1x16x256xf32, #tpu.memory_space<vmem>>) attributes {dimension_semantics = [#tpu.dimension_semantics<parallel>, #tpu.dimension_semantics<parallel>], iteration_bounds = array<i64: 2, 1>, scalar_prefetch = 0 : i64, scratch_operands = 0 : i64, tpu.core_type = #tpu.core_type<tc>, window_params = [{transform_indices = @transform_0, window_bounds = array<i64: 1, 1, 16, 256>}, {transform_indices = @transform_1, window_bounds = array<i64: 1, 16, 1>}, {transform_indices = @transform_2, window_bounds = array<i64: 1, 16, 1>}, {pipeline_mode = #tpu.pipeline_mode<synchronous>, transform_indices = @transform_3, window_bounds = array<i64: 16, 16>}, {transform_indices = @transform_4, window_bounds = array<i64: 1, 1, 16, 256>}]} {
    %c0 = arith.constant 0 : index
    %c0_0 = arith.constant 0 : index
    %c0_1 = arith.constant 0 : index
    %c0_2 = arith.constant 0 : index
    %0 = vector.load %arg2[%c0, %c0_0, %c0_1, %c0_2] : memref<1x1x16x256xf32, #tpu.memory_space<vmem>>, vector<1x1x16x256xf32>
    %cst = arith.constant dense<0.000000e+00> : vector<1x1x16xf32>
    %1 = vector.multi_reduction <add>, %0, %cst [3] : vector<1x1x16x256xf32> to vector<1x1x16xf32>
    %2 = vector.shape_cast %1 : vector<1x1x16xf32> to vector<1x1x16x1xf32>
    %3 = vector.shape_cast %2 : vector<1x1x16x1xf32> to vector<16x1xf32>
    %4 = arith.mulf %0, %0 : vector<1x1x16x256xf32>
    %cst_3 = arith.constant dense<0.000000e+00> : vector<1x1x16xf32>
    %5 = vector.multi_reduction <add>, %4, %cst_3 [3] : vector<1x1x16x256xf32> to vector<1x1x16xf32>
    %6 = vector.shape_cast %5 : vector<1x1x16xf32> to vector<1x1x16x1xf32>
    %7 = vector.shape_cast %6 : vector<1x1x16x1xf32> to vector<16x1xf32>
    %8 = tpu.concatenate %3, %7 in 1 : vector<16x1xf32>, vector<16x1xf32> -> vector<16x2xf32>
    %c0_4 = arith.constant 0 : index
    %c0_5 = arith.constant 0 : index
    %9 = vector.load %arg5[%c0_4, %c0_5] : memref<16x16xf32, #tpu.memory_space<vmem>>, vector<16x16xf32>
    %cst_6 = arith.constant dense<0.000000e+00> : vector<16x2xf32>
    %10 = tpu.matmul %9, %8, %cst_6 {dimension_numbers = #tpu.dot_dimension_numbers<[1], [0], [0], [1], [0, 0, 1, 1], [], []>} : vector<16x16xf32>, vector<16x2xf32>, vector<16x2xf32> -> vector<16x2xf32>
    %11 = vector.extract_strided_slice %10 {offsets = [0, 0], sizes = [16, 1], strides = [1, 1]} : vector<16x2xf32> to vector<16x1xf32>
    %12 = vector.extract_strided_slice %10 {offsets = [0, 1], sizes = [16, 1], strides = [1, 1]} : vector<16x2xf32> to vector<16x1xf32>
    %cst_7 = arith.constant 9.765625E-4 : f32
    %13 = vector.broadcast %cst_7 : f32 to vector<16x1xf32>
    %14 = arith.mulf %11, %13 : vector<16x1xf32>
    %15 = arith.mulf %11, %11 : vector<16x1xf32>
    %cst_8 = arith.constant 9.765625E-4 : f32
    %16 = vector.broadcast %cst_8 : f32 to vector<16x1xf32>
    %17 = arith.mulf %15, %16 : vector<16x1xf32>
    %18 = arith.subf %12, %17 : vector<16x1xf32>
    %cst_9 = arith.constant 9.77517105E-4 : f32
    %19 = vector.broadcast %cst_9 : f32 to vector<16x1xf32>
    %20 = arith.mulf %18, %19 : vector<16x1xf32>
    %cst_10 = arith.constant 0.000000e+00 : f32
    %21 = vector.broadcast %cst_10 : f32 to vector<16x1xf32>
    %22 = arith.maximumf %20, %21 : vector<16x1xf32>
    %23 = math.sqrt %22 : vector<16x1xf32>
    %cst_11 = arith.constant 1.000000e-10 : f32
    %24 = vector.broadcast %cst_11 : f32 to vector<16x1xf32>
    %25 = arith.addf %23, %24 : vector<16x1xf32>
    %cst_12 = arith.constant 1.000000e+00 : f32
    %26 = vector.broadcast %cst_12 : f32 to vector<16x1xf32>
    %27 = arith.divf %26, %25 : vector<16x1xf32>
    %c0_13 = arith.constant 0 : index
    %c0_14 = arith.constant 0 : index
    %c0_15 = arith.constant 0 : index
    %28 = vector.load %arg3[%c0_13, %c0_14, %c0_15] : memref<1x16x1xf32, #tpu.memory_space<vmem>>, vector<1x16x1xf32>
    %29 = vector.shape_cast %28 : vector<1x16x1xf32> to vector<16x1xf32>
    %c0_16 = arith.constant 0 : index
    %c0_17 = arith.constant 0 : index
    %c0_18 = arith.constant 0 : index
    %30 = vector.load %arg4[%c0_16, %c0_17, %c0_18] : memref<1x16x1xf32, #tpu.memory_space<vmem>>, vector<1x16x1xf32>
    %31 = vector.shape_cast %30 : vector<1x16x1xf32> to vector<16x1xf32>
    %32 = arith.mulf %29, %27 : vector<16x1xf32>
    %33 = arith.mulf %14, %32 : vector<16x1xf32>
    %34 = arith.subf %31, %33 : vector<16x1xf32>
    %c0_19 = arith.constant 0 : index
    %c0_20 = arith.constant 0 : index
    %c0_21 = arith.constant 0 : index
    %c0_22 = arith.constant 0 : index
    %35 = vector.load %arg2[%c0_19, %c0_20, %c0_21, %c0_22] : memref<1x1x16x256xf32, #tpu.memory_space<vmem>>, vector<1x1x16x256xf32>
    %36 = vector.shape_cast %32 : vector<16x1xf32> to vector<1x1x16x1xf32>
    %37 = vector.broadcast %36 : vector<1x1x16x1xf32> to vector<1x1x16x256xf32>
    %38 = arith.mulf %35, %37 : vector<1x1x16x256xf32>
    %39 = vector.shape_cast %34 : vector<16x1xf32> to vector<1x1x16x1xf32>
    %40 = vector.broadcast %39 : vector<1x1x16x1xf32> to vector<1x1x16x256xf32>
    %41 = arith.addf %38, %40 : vector<1x1x16x256xf32>
    %c0_23 = arith.constant 0 : index
    %c0_24 = arith.constant 0 : index
    %c0_25 = arith.constant 0 : index
    %c0_26 = arith.constant 0 : index
    %42 = vector.load %arg6[%c0_23, %c0_24, %c0_25, %c0_26] : memref<1x1x16x256xf32, #tpu.memory_space<vmem>>, vector<1x1x16x256xf32>
    tpu.vector_store %arg6[%c0_23, %c0_24, %c0_25, %c0_26], %41 {strides = array<i32>} : memref<1x1x16x256xf32, #tpu.memory_space<vmem>>, vector<1x1x16x256xf32>,
    return
  }
  func.func @transform_0(%arg0: i32, %arg1: i32) -> (i32, i32, i32, i32) {
    %c0_i32 = arith.constant 0 : i32
    %c0_i32_0 = arith.constant 0 : i32
    %c0_i32_1 = arith.constant 0 : i32
    return %arg0, %arg1, %c0_i32, %c0_i32_0 : i32, i32, i32, i32
  }
  func.func @transform_1(%arg0: i32, %arg1: i32) -> (i32, i32, i32) {
    %c0_i32 = arith.constant 0 : i32
    %c0_i32_0 = arith.constant 0 : i32
    %c0_i32_1 = arith.constant 0 : i32
    return %arg1, %c0_i32, %c0_i32_0 : i32, i32, i32
  }
  func.func @transform_2(%arg0: i32, %arg1: i32) -> (i32, i32, i32) {
    %c0_i32 = arith.constant 0 : i32
    %c0_i32_0 = arith.constant 0 : i32
    %c0_i32_1 = arith.constant 0 : i32
    return %arg1, %c0_i32, %c0_i32_0 : i32, i32, i32
  }
  func.func @transform_3(%arg0: i32, %arg1: i32) -> (i32, i32) {
    %c0_i32 = arith.constant 0 : i32
    %c0_i32_0 = arith.constant 0 : i32
    %c0_i32_1 = arith.constant 0 : i32
    return %c0_i32, %c0_i32_0 : i32, i32
  }
  func.func @transform_4(%arg0: i32, %arg1: i32) -> (i32, i32, i32, i32) {
    %c0_i32 = arith.constant 0 : i32
    %c0_i32_0 = arith.constant 0 : i32
    %c0_i32_1 = arith.constant 0 : i32
    return %arg0, %arg1, %c0_i32, %c0_i32_0 : i32, i32, i32, i32
  }
}

</mosaic_0001>

<llo_original>
// kernel: tpu_custom_call.1
$region0: #{tpu_custom_call.1}
  #allocation0 [shape = 'u32[]', space=smem, size = 0x4, offset = 0x4, fixed_abs, tag = 'smem constant byte address 0x4 - core index']
  #allocation1 [shape = 'u32[72,128]{1,0:T(1,128)}', space=vmem, size = 0x9000, scoped, tag = 'internal scratch']
  %s0 = inlined_call_operand.hbm [shape: f32[2,1,16,256], index: 0, kind: input, shape index: {}]
  %s1 = inlined_call_operand.vmem [shape: f32[1,16,1], index: 1, kind: input, shape index: {}]
  %s2 = inlined_call_operand.vmem [shape: f32[1,16,1], index: 2, kind: input, shape index: {}]
  %s3 = inlined_call_operand.vmem [shape: f32[16,16], index: 3, kind: input, shape index: {}]
  %s4 = inlined_call_operand.hbm [shape: f32[2,1,16,256], index: 4, kind: output, shape index: {}]
  %s5 = sld [smem:[#allocation0]]
  $region53: #{tpu_custom_call.1} parent=0
    _
  %s7 = ssub.s32 1, %s5
  %s8 = scalar_select 0, %s7, %s5
  $region1: #{tpu_custom_call.1} parent=0
    #allocation2 [shape = 'u8[32768]{0}', space=vmem, size = 0x8000, scoped, tag = 'input window, operand 0']
    #allocation3 [shape = 's32[2]{0}', space=sflag, size = 0x8, scoped, tag = 'scoped memory for tpu_custom_call.1']
    #allocation4 [shape = 's32[2]{0}', space=sflag, size = 0x8, scoped, tag = 'scoped memory for tpu_custom_call.1']
    #allocation5 [shape = 'u8[32768]{0}', space=vmem, size = 0x8000, scoped, tag = 'output window, operand 0']
    %9 = vsyncpa [#allocation3], 0
    %s10 = scalar_lea.sflag [#allocation3], 1
    %11 = vsyncpa %s10, 0
    %12 = vsyncpa [#allocation4], 0
    %s13 = scalar_lea.sflag [#allocation4], 1
    %14 = vsyncpa %s13, 0
    loop: start=0, step=1, limit=4
    $region2: #{tpu_custom_call.1} parent=1 // loop_pre_header
      _
    $region3: #{tpu_custom_call.1} parent=1 // loop_header
      %s16 = sphi 0, %s20
      %p17 = scmp.ge.s32.totalorder %s16, 4
      %s23 = sphi 0, %s35
      %s24 = sphi 0, %s31
      %s25 = sphi 0, %s23
      %s26 = sphi 0, %s24
      %s27 = sphi 0, %s25
      %s28 = sphi 0, %s26
      %s40 = sphi 0, %s42
      %s43 = sphi 0, %s40
      %s44 = sphi 0, %s43
      %s60 = sphi 0, %s44
      %s66 = sphi 0, %s68
      %s69 = sphi 0, %s66
      %s70 = sphi 0, %s69
      %s86 = sphi 0, %s70
      %s92 = sphi 0, %s94
      %s95 = sphi 0, %s92
      %s96 = sphi 0, %s95
      %s112 = sphi 0, %s96
      %s116 = sphi 0, %s116
      %s118 = sphi 0, %s116
      %s119 = sphi 0, %s118
      %s133 = sphi 0, %s119
      %s141 = sphi 0, %s143
      %s144 = sphi 0, %s141
      %s145 = sphi 0, %s144
      %s161 = sphi 0, %s145
    $region4: #{tpu_custom_call.1} parent=1 // loop_header_branch
      %19 = sbr.rel (%p17) target = $region8
    $region5: #{tpu_custom_call.1} parent=1 // loop_body
      %s21 = ssub.s32 %s16, 1
      %s22 = ssub.s32 %s16, 2
      %s29 = sadd.s32 1, %s24
      %p30 = scmp.ge.s32.totalorder %s29, 1
      %s31 = scalar_select %p30, 0, %s29
      %s32 = sadd.s32 1, %s23
      %s33 = scalar_select %p30, %s32, %s23
      %p34 = scmp.ge.s32.totalorder %s33, 2
      %s35 = scalar_select %p34, 0, %s33
      %s36 = ssub.s32 %s23, %s35
      %s37 = ssub.s32 %s24, %s31
      %s38 = sor.u32 %s36, %s37
      %p39 = scmp.eq.s32.totalorder %s38, 0
      %s41 = sadd.s32 %s40, 1
      %s42 = scalar_select %p39, %s40, %s41
      %p45 = pneg %p39
      %p46 = scmp.eq.s32.totalorder %s16, 1
      %p47 = por %p45, %p46
      %p48 = scmp.ne.s32.totalorder %s40, %s43
      %p49 = scmp.eq.s32.totalorder %s16, 0
      %p50 = por %p48, %p49
      %p51 = scmp.ne.s32.totalorder %s40, %s43
      %p52 = scmp.eq.s32.totalorder %s21, 1
      %p53 = por %p51, %p52
      %p54 = scmp.ne.s32.totalorder %s43, %s44
      %p55 = scmp.eq.s32.totalorder %s21, 0
      %p56 = por %p54, %p55
      %p57 = scmp.ne.s32.totalorder %s43, %s44
      %p58 = scmp.eq.s32.totalorder %s22, 1
      %p59 = por %p57, %p58
      %p61 = scmp.ne.s32.totalorder %s44, %s60
      %p62 = scmp.eq.s32.totalorder %s22, 0
      %p63 = por %p61, %p62
      %s64 = ssub.s32 %s24, %s31
      %p65 = scmp.eq.s32.totalorder %s64, 0
      %s67 = sadd.s32 %s66, 1
      %s68 = scalar_select %p65, %s66, %s67
      %p71 = pneg %p65
      %p72 = scmp.eq.s32.totalorder %s16, 1
      %p73 = por %p71, %p72
      %p74 = scmp.ne.s32.totalorder %s66, %s69
      %p75 = scmp.eq.s32.totalorder %s16, 0
      %p76 = por %p74, %p75
      %p77 = scmp.ne.s32.totalorder %s66, %s69
      %p78 = scmp.eq.s32.totalorder %s21, 1
      %p79 = por %p77, %p78
      %p80 = scmp.ne.s32.totalorder %s69, %s70
      %p81 = scmp.eq.s32.totalorder %s21, 0
      %p82 = por %p80, %p81
      %p83 = scmp.ne.s32.totalorder %s69, %s70
      %p84 = scmp.eq.s32.totalorder %s22, 1
      %p85 = por %p83, %p84
      %p87 = scmp.ne.s32.totalorder %s70, %s86
      %p88 = scmp.eq.s32.totalorder %s22, 0
      %p89 = por %p87, %p88
      %s90 = ssub.s32 %s24, %s31
      %p91 = scmp.eq.s32.totalorder %s90, 0
      %s93 = sadd.s32 %s92, 1
      %s94 = scalar_select %p91, %s92, %s93
      %p97 = pneg %p91
      %p98 = scmp.eq.s32.totalorder %s16, 1
      %p99 = por %p97, %p98
      %p100 = scmp.ne.s32.totalorder %s92, %s95
      %p101 = scmp.eq.s32.totalorder %s16, 0
      %p102 = por %p100, %p101
      %p103 = scmp.ne.s32.totalorder %s92, %s95
      %p104 = scmp.eq.s32.totalorder %s21, 1
      %p105 = por %p103, %p104
      %p106 = scmp.ne.s32.totalorder %s95, %s96
      %p107 = scmp.eq.s32.totalorder %s21, 0
      %p108 = por %p106, %p107
      %p109 = scmp.ne.s32.totalorder %s95, %s96
      %p110 = scmp.eq.s32.totalorder %s22, 1
      %p111 = por %p109, %p110
      %p113 = scmp.ne.s32.totalorder %s96, %s112
      %p114 = scmp.eq.s32.totalorder %s22, 0
      %p115 = por %p113, %p114
      %s117 = sadd.s32 %s116, 1
      %p120 = scmp.eq.s32.totalorder %s16, 1
      %p121 = scmp.ne.s32.totalorder %s116, %s118
      %p122 = scmp.eq.s32.totalorder %s16, 0
      %p123 = por %p121, %p122
      %p124 = scmp.ne.s32.totalorder %s116, %s118
      %p125 = scmp.eq.s32.totalorder %s21, 1
      %p126 = por %p124, %p125
      %p127 = scmp.ne.s32.totalorder %s118, %s119
      %p128 = scmp.eq.s32.totalorder %s21, 0
      %p129 = por %p127, %p128
      %p130 = scmp.ne.s32.totalorder %s118, %s119
      %p131 = scmp.eq.s32.totalorder %s22, 1
      %p132 = por %p130, %p131
      %p134 = scmp.ne.s32.totalorder %s119, %s133
      %p135 = scmp.eq.s32.totalorder %s22, 0
      %p136 = por %p134, %p135
      %s137 = ssub.s32 %s23, %s35
      %s138 = ssub.s32 %s24, %s31
      %s139 = sor.u32 %s137, %s138
      %p140 = scmp.eq.s32.totalorder %s139, 0
      %s142 = sadd.s32 %s141, 1
      %s143 = scalar_select %p140, %s141, %s142
      %p146 = pneg %p140
      %p147 = scmp.eq.s32.totalorder %s16, 1
      %p148 = por %p146, %p147
      %p149 = scmp.ne.s32.totalorder %s141, %s144
      %p150 = scmp.eq.s32.totalorder %s16, 0
      %p151 = por %p149, %p150
      %p152 = scmp.ne.s32.totalorder %s141, %s144
      %p153 = scmp.eq.s32.totalorder %s21, 1
      %p154 = por %p152, %p153
      %p155 = scmp.ne.s32.totalorder %s144, %s145
      %p156 = scmp.eq.s32.totalorder %s21, 0
      %p157 = por %p155, %p156
      %p158 = scmp.ne.s32.totalorder %s144, %s145
      %p159 = scmp.eq.s32.totalorder %s22, 1
      %p160 = por %p158, %p159
      %p162 = scmp.ne.s32.totalorder %s145, %s161
      %p163 = scmp.eq.s32.totalorder %s22, 0
      %p164 = por %p162, %p163
      %p165 = scmp.le.s32.totalorder 1, %s16
      %p166 = scmp.lt.s32.totalorder %s16, 3
      %p167 = pnand %p165, %p166
      %p168 = pneg %p167
      // Predicated region
      $region9: #{tpu_custom_call.1} parent=5 // pred_check
        _
      $region10: #{tpu_custom_call.1} parent=5 // pred_check_branch
        %170 = sbr.rel (%p167) target = $region12
      $region11: #{tpu_custom_call.1} parent=5 // pred_region
        %s171 = ssub.s32 %s16, 1
        // Predicated region
        $region13: #{tpu_custom_call.1} parent=11 // pred_check
          %p172 = pneg %p82
        $region14: #{tpu_custom_call.1} parent=11 // pred_check_branch
          %174 = sbr.rel (%p172) target = $region16
        $region15: #{tpu_custom_call.1} parent=11 // pred_region
          %p175 = scmp.lt.s32.totalorder %s26, 0
          %s176 = scalar_select %p175, %s26, 0
          %s177 = smul.addr %s176, 2
          %s178 = smul.addr %s177, 8
          %s179 = scalar_lea.vmem %s1, %s178
        $region16: #{tpu_custom_call.1} parent=11 // pred_fallthru
          _
        // Predicated region
        $region17: #{tpu_custom_call.1} parent=11 // pred_check
          %p180 = pneg %p108
        $region18: #{tpu_custom_call.1} parent=11 // pred_check_branch
          %182 = sbr.rel (%p180) target = $region20
        $region19: #{tpu_custom_call.1} parent=11 // pred_region
          %p183 = scmp.lt.s32.totalorder %s26, 0
          %s184 = scalar_select %p183, %s26, 0
          %s185 = smul.addr %s184, 2
          %s186 = smul.addr %s185, 8
          %s187 = scalar_lea.vmem %s2, %s186
        $region20: #{tpu_custom_call.1} parent=11 // pred_fallthru
          _
        // Predicated region
        $region21: #{tpu_custom_call.1} parent=11 // pred_check
          %p188 = pneg %p129
        $region22: #{tpu_custom_call.1} parent=11 // pred_check_branch
          %190 = sbr.rel (%p188) target = $region24
        $region23: #{tpu_custom_call.1} parent=11 // pred_region
          _
        $region24: #{tpu_custom_call.1} parent=11 // pred_fallthru
          _
      $region12: #{tpu_custom_call.1} parent=5 // pred_fallthru
        _
      %p191 = scmp.lt.s32.totalorder %s16, 2
      // Predicated region
      $region25: #{tpu_custom_call.1} parent=5 // pred_check
        %p192 = pneg %p191
      $region26: #{tpu_custom_call.1} parent=5 // pred_check_branch
        %194 = sbr.rel (%p192) target = $region28
      $region27: #{tpu_custom_call.1} parent=5 // pred_region
        // Predicated region
        $region29: #{tpu_custom_call.1} parent=27 // pred_check
          %p195 = pneg %p50
        $region30: #{tpu_custom_call.1} parent=27 // pred_check_branch
          %197 = sbr.rel (%p195) target = $region32
        $region31: #{tpu_custom_call.1} parent=27 // pred_region
          %s198 = sand.u32 %s40, 1
          %s199 = scalar_lea.sflag [#allocation3], %s198
          %s200 = sand.u32 %s40, 1
          %s201 = smul.addr %s200, 32
          %s202 = scalar_lea.vmem [#allocation2], %s201
          %204 = vsyncadd %s199, 0
          %s205 = smul.addr %s24, 4
          %s206 = smul.addr %s23, 4
          %s207 = sadd.s32 %s205, %s206
          %s208 = smul.addr %s207, 8
          %s209 = scalar_lea.hbm %s0, %s208
          %s210 = sshll.u32 %s209, 4
          %s211 = int_to_ptr.hbm [resolvable:$true] %s210
          %s212 = sshll.u32 %s202, 4
          %s213 = int_to_ptr.vmem [resolvable:$true] %s212
          %218 = dma.hbm_to_vmem [thread:$0]  %s211, 512, %s213, %s199, 256, 256, 16
        $region32: #{tpu_custom_call.1} parent=27 // pred_fallthru
          _
      $region28: #{tpu_custom_call.1} parent=5 // pred_fallthru
        _
      %p219 = scmp.le.s32.totalorder 1, %s16
      %p220 = scmp.lt.s32.totalorder %s16, 3
      %p221 = pnand %p219, %p220
      %p222 = pneg %p221
      // Predicated region
      $region33: #{tpu_custom_call.1} parent=5 // pred_check
        _
      $region34: #{tpu_custom_call.1} parent=5 // pred_check_branch
        %224 = sbr.rel (%p221) target = $region36
      $region35: #{tpu_custom_call.1} parent=5 // pred_region
        %s225 = ssub.s32 %s16, 1
        %s226 = sand.u32 %s43, 1
        %s227 = scalar_lea.sflag [#allocation3], %s226
        %s228 = sand.u32 %s43, 1
        %s229 = smul.addr %s228, 32
        %s230 = scalar_lea.vmem [#allocation2], %s229
        // Predicated region
        $region37: #{tpu_custom_call.1} parent=35 // pred_check
          %p231 = pneg %p56
        $region38: #{tpu_custom_call.1} parent=35 // pred_check_branch
          %233 = sbr.rel (%p231) target = $region40
        $region39: #{tpu_custom_call.1} parent=35 // pred_region
          %235 = dma.done %s227, 512
        $region40: #{tpu_custom_call.1} parent=35 // pred_fallthru
          _
        %s236 = sand.u32 %s43, 1
        %s237 = scalar_lea.sflag [#allocation3], %s236
        %s238 = sand.u32 %s43, 1
        %s239 = smul.addr %s238, 32
        %s240 = scalar_lea.vmem [#allocation2], %s239
        %p241 = pneg %p56
        %p242 = pneg %p53
        %p243 = scmp.lt.s32.totalorder %s26, 0
        %s244 = scalar_select %p243, %s26, 0
        %s245 = smul.addr %s244, 2
        %s246 = smul.addr %s245, 8
        %s247 = scalar_lea.vmem %s1, %s246
        %p248 = pneg %p82
        %p249 = pneg %p79
        %p250 = scmp.lt.s32.totalorder %s26, 0
        %s251 = scalar_select %p250, %s26, 0
        %s252 = smul.addr %s251, 2
        %s253 = smul.addr %s252, 8
        %s254 = scalar_lea.vmem %s2, %s253
        %p255 = pneg %p108
        %p256 = pneg %p105
        %p257 = pneg %p129
        %p258 = pneg %p126
        %p259 = pneg %p157
        %p260 = pneg %p154
        %s261 = sand.u32 %s144, 1
        %s262 = scalar_lea.sflag [#allocation4], %s261
        %s263 = sand.u32 %s144, 1
        %s264 = smul.addr %s263, 32
        %s265 = scalar_lea.vmem [#allocation5], %s264
        %p266 = scmp.lt.s32.totalorder %s26, 0
        %s267 = scalar_select %p266, %s26, 0
        %s268 = smul.addr %s267, 2
        %s269 = smul.addr %s268, 8
        %s270 = scalar_lea.vmem %s1, %s269
        %p271 = scmp.lt.s32.totalorder %s26, 0
        %s272 = scalar_select %p271, %s26, 0
        %s273 = smul.addr %s272, 2
        %s274 = smul.addr %s273, 8
        %s275 = scalar_lea.vmem %s2, %s274
        %v276 = vld [vmem:[%s230] sm:$0xff]
        %v277 = vld [vmem:[%s230 + $0x8] sm:$0xff]
        %v278 = vld [vmem:[%s230 + $0x10] sm:$0xff]
        %v279 = vld [vmem:[%s230 + $0x18] sm:$0xff]
        %v280 = vadd.f32 %v276, %v277
        %281 = vadd.xlane.f32.xlu0 %v280
        %v282 = vpop.xlane.xlu0 %281
        %v283 = vadd.f32 %v278, %v279
        %284 = vadd.xlane.f32.xlu0 %v283
        %v285 = vpop.xlane.xlu0 %284
        %v286 = vmul.f32 %v276, %v276
        %v287 = vmul.f32 %v277, %v277
        %v288 = vmul.f32 %v278, %v278
        %v289 = vmul.f32 %v279, %v279
        %v290 = vadd.f32 %v286, %v287
        %291 = vadd.xlane.f32.xlu0 %v290
        %v292 = vpop.xlane.xlu0 %291
        %v293 = vadd.f32 %v288, %v289
        %294 = vadd.xlane.f32.xlu0 %v293
        %v295 = vpop.xlane.xlu0 %294
        %vm296 = vcmask 7168
        %v297 = vsel %vm296, %v282, %v292
        %v298 = vsel %vm296, %v285, %v295
        %v299 = vld [vmem:[%s3] sm:$0xff]
        %v300 = vld [vmem:[%s3 + $0x8] sm:$0xff]
        %vm301 = vcmask 130048
        %v303 = vsel %vm301, %v299, 0
        %v306 = vsel %vm301, %v300, 0
        %308 = vmatpush.msra.mxu0 0.0
        %309 = vmatpush.msra.mxu0 0.0
        %310 = vmatpush.msra.mxu0 0.0
        %311 = vmatpush.msra.mxu0 0.0
        %312 = vmatpush.msra.mxu0 0.0
        %313 = vmatpush.msra.mxu0 0.0
        %314 = vmatpush.msra.mxu0 0.0
        %315 = vmatpush.msra.mxu0 0.0
        %316 = vmatpush.msra.mxu0 0.0
        %317 = vmatpush.msra.mxu0 0.0
        %318 = vmatpush.msra.mxu0 0.0
        %319 = vmatpush.msra.mxu0 0.0
        %320 = vmatpush.msra.mxu0 0.0
        %321 = vmatpush.msra.mxu0 0.0
        %322 = vmatpush.msra.mxu0 %v298
        %323 = vmatpush.msra.mxu0 %v297
        %324 = vmatmul.f32.gmra.mxu0 %v303
        %v325 = vpop.f32.mrf.mxu0
        %v326 = vadd.f32 0.0, %v325
        %327 = vmatmul.f32.gmra.mxu0 %v306
        %v328 = vpop.f32.mrf.mxu0
        %v329 = vadd.f32 0.0, %v328
        %330 = vdwg.mxu0
        %v331 = vmul.f32 %v326, 0.0009765625
        %v332 = vmul.f32 %v329, 0.0009765625
        %v333 = vmul.f32 %v326, %v326
        %v334 = vmul.f32 %v329, %v329
        %v335 = vmul.f32 %v333, 0.0009765625
        %v336 = vmul.f32 %v334, 0.0009765625
        %339 = vrot.lane.b32.xlu0 %v335, 1
        %v340 = vpop.permute.xlu0 %339
        %341 = vrot.lane.b32.xlu0 %v336, 1
        %v342 = vpop.permute.xlu0 %341
        %v345 = vsub.f32 %v326, %v340
        %v346 = vsub.f32 %v329, %v342
        %v347 = vmul.f32 %v345, 0.0009775171
        %v348 = vmul.f32 %v346, 0.0009775171
        %v349 = vmax.f32 %v347, 0.0
        %v350 = vmax.f32 %v348, 0.0
        %v351 = vrsqrt.pop %v349
        %v352 = vmul.f32 %v351, %v349
        %v353 = vmul.f32 %v352, %v351
        %v354 = vmul.f32 0.5, %v353
        %v355 = vsub.f32 1.5, %v354
        %v356 = vmul.f32 %v351, %v355
        %v357 = vmul.f32 %v349, %v356
        %vm358 = vcmp.eq.f32.partialorder %v349, inf
        %v359 = vsel %vm358, %v349, %v357
        %vm360 = vcmp.eq.f32.partialorder %v349, 0.0
        %v361 = vand.u32 %v349, 2147483648
        %v362 = vsel %vm360, %v361, %v359
        %v363 = vrsqrt.pop %v350
        %v364 = vmul.f32 %v363, %v350
        %v365 = vmul.f32 %v364, %v363
        %v366 = vmul.f32 0.5, %v365
        %v367 = vsub.f32 1.5, %v366
        %v368 = vmul.f32 %v363, %v367
        %v369 = vmul.f32 %v350, %v368
        %vm370 = vcmp.eq.f32.partialorder %v350, inf
        %v371 = vsel %vm370, %v350, %v369
        %vm372 = vcmp.eq.f32.partialorder %v350, 0.0
        %v373 = vand.u32 %v350, 2147483648
        %v374 = vsel %vm372, %v373, %v371
        %v375 = vadd.f32 %v362, 1e-10
        %v376 = vadd.f32 %v374, 1e-10
        %v377 = vrcp.pop %v375
        %v378 = vmul.f32 %v375, %v377
        %v379 = vsub.f32 1.0, %v378
        %v380 = vmul.f32 %v377, %v379
        %v381 = vadd.f32 %v377, %v380
        %vm382 = vweird.f32 %v375
        %vm383 = vweird.f32 %v377
        %vm384 = vmor %vm382, %vm383
        %v385 = vsel %vm384, %v377, %v381
        %v386 = vand.u32 2147483647, %v375
        %vm387 = vcmp.eq.f32.partialorder %v386, 8.507059e+37
        %v388 = vand.u32 %v375, 2147483648
        %v389 = vor.u32 1.1754944e-38, %v388
        %v390 = vsel %vm387, %v389, %v385
        %v391 = vmul.f32 1.0, %v390
        %v392 = vrcp.pop %v376
        %v393 = vmul.f32 %v376, %v392
        %v394 = vsub.f32 1.0, %v393
        %v395 = vmul.f32 %v392, %v394
        %v396 = vadd.f32 %v392, %v395
        %vm397 = vweird.f32 %v376
        %vm398 = vweird.f32 %v392
        %vm399 = vmor %vm397, %vm398
        %v400 = vsel %vm399, %v392, %v396
        %v401 = vand.u32 2147483647, %v376
        %vm402 = vcmp.eq.f32.partialorder %v401, 8.507059e+37
        %v403 = vand.u32 %v376, 2147483648
        %v404 = vor.u32 1.1754944e-38, %v403
        %v405 = vsel %vm402, %v404, %v400
        %v406 = vmul.f32 1.0, %v405
        %v407 = vld [vmem:[%s270] sm:$0xff]
        %v408 = vld [vmem:[%s270 + $0x8] sm:$0xff]
        %v409 = vld [vmem:[%s275] sm:$0xff]
        %v410 = vld [vmem:[%s275 + $0x8] sm:$0xff]
        %413 = vrot.lane.b32.xlu0 %v391, 127
        %v414 = vpop.permute.xlu0 %413
        %415 = vrot.lane.b32.xlu0 %v406, 127
        %v416 = vpop.permute.xlu0 %415
        %v419 = vmul.f32 %v407, %v414
        %v420 = vmul.f32 %v408, %v416
        %v421 = vmul.f32 %v331, %v419
        %v422 = vmul.f32 %v332, %v420
        %v423 = vsub.f32 %v409, %v421
        %v424 = vsub.f32 %v410, %v422
        %426 = vset.pattern.permute.xlu0 0
        %427 = vperm.xlu0 %426, %v419
        %v428 = vpop.permute.xlu0 %427
        %431 = vset.pattern.permute.xlu0 0
        %432 = vperm.xlu0 %431, %v420
        %v433 = vpop.permute.xlu0 %432
        %v435 = vmul.f32 %v276, %v428
        %v436 = vmul.f32 %v277, %v428
        %v437 = vmul.f32 %v278, %v433
        %v438 = vmul.f32 %v279, %v433
        %440 = vset.pattern.permute.xlu0 0
        %441 = vperm.xlu0 %440, %v423
        %v442 = vpop.permute.xlu0 %441
        %445 = vset.pattern.permute.xlu0 0
        %446 = vperm.xlu0 %445, %v424
        %v447 = vpop.permute.xlu0 %446
        %v449 = vadd.f32 %v435, %v442
        %v450 = vadd.f32 %v436, %v442
        %v451 = vadd.f32 %v437, %v447
        %v452 = vadd.f32 %v438, %v447
        %453 = vst [vmem:[%s265] sm:$0xff] %v449
        %454 = vst [vmem:[%s265 + $0x8] sm:$0xff] %v450
        %455 = vst [vmem:[%s265 + $0x10] sm:$0xff] %v451
        %456 = vst [vmem:[%s265 + $0x18] sm:$0xff] %v452
        %s457 = sand.u32 %s144, 1
        %s458 = scalar_lea.sflag [#allocation4], %s457
        %s459 = sand.u32 %s144, 1
        %s460 = smul.addr %s459, 32
        %s461 = scalar_lea.vmem [#allocation5], %s460
        // Predicated region
        $region41: #{tpu_custom_call.1} parent=35 // pred_check
          %p462 = pneg %p154
        $region42: #{tpu_custom_call.1} parent=35 // pred_check_branch
          %464 = sbr.rel (%p462) target = $region44
        $region43: #{tpu_custom_call.1} parent=35 // pred_region
          %466 = vsyncadd %s458, 0
          %s467 = smul.addr %s26, 4
          %s468 = smul.addr %s25, 4
          %s469 = sadd.s32 %s467, %s468
          %s470 = smul.addr %s469, 8
          %s471 = scalar_lea.hbm %s4, %s470
          %s472 = sshll.u32 %s461, 4
          %s473 = int_to_ptr.vmem [resolvable:$true] %s472
          %s474 = sshll.u32 %s471, 4
          %s475 = int_to_ptr.hbm [resolvable:$true] %s474
          %480 = dma.vmem_to_hbm [thread:$0]  %s473, 512, %s475, %s458, 256, 256, 16
        $region44: #{tpu_custom_call.1} parent=35 // pred_fallthru
          _
      $region36: #{tpu_custom_call.1} parent=5 // pred_fallthru
        _
      %p481 = scmp.le.s32.totalorder 2, %s16
      // Predicated region
      $region45: #{tpu_custom_call.1} parent=5 // pred_check
        %p482 = pneg %p481
      $region46: #{tpu_custom_call.1} parent=5 // pred_check_branch
        %484 = sbr.rel (%p482) target = $region48
      $region47: #{tpu_custom_call.1} parent=5 // pred_region
        %s485 = ssub.s32 %s16, 2
        // Predicated region
        $region49: #{tpu_custom_call.1} parent=47 // pred_check
          %p486 = pneg %p160
        $region50: #{tpu_custom_call.1} parent=47 // pred_check_branch
          %488 = sbr.rel (%p486) target = $region52
        $region51: #{tpu_custom_call.1} parent=47 // pred_region
          %s489 = sand.u32 %s145, 1
          %s490 = scalar_lea.sflag [#allocation4], %s489
          %s491 = sand.u32 %s145, 1
          %s492 = smul.addr %s491, 32
          %s493 = scalar_lea.vmem [#allocation5], %s492
          %495 = dma.done %s490, 512
        $region52: #{tpu_custom_call.1} parent=47 // pred_fallthru
          _
      $region48: #{tpu_custom_call.1} parent=5 // pred_fallthru
        _
    $region6: #{tpu_custom_call.1} parent=1 // loop_footer
      %s20 = sadd.s32 1, %s16
    $region7: #{tpu_custom_call.1} parent=1 // loop_footer_branch
      %15 = sbr.rel target = $region3
    $region8: #{tpu_custom_call.1} parent=1 // loop_exit
      _
    %496 = vsyncpa [#allocation3], 1
    %s497 = scalar_lea.sflag [#allocation3], 1
    %498 = vsyncpa %s497, 1
    %499 = vsyncpa [#allocation4], 1
    %s500 = scalar_lea.sflag [#allocation4], 1
    %501 = vsyncpa %s500, 1

</llo_original>
